<compile_context>
chip_gen: v6e
topology: v6e:2x2x1
jax: 0.10.0
libtpu: 0.0.40
codegen_flags: <defaults>
</compile_context>

<pallas_src>
import jax
import jax.numpy as jnp
from jax.experimental import pallas as pl
from jax.experimental.pallas import tpu as pltpu


def _mm(a, w, b):
    return jnp.dot(a, w, preferred_element_type=jnp.float32) + b


def multimodal_kernel(
    img_ref, tab_ref,
    wimg_ref, bimg_ref,                 # composed image head: pool+backbone+convs+fc
    wt1_ref, bt1_ref,                   # tabular fc1 (+ folded eval-mode bn1)
    wt2_ref, bt2_ref,                   # tabular fc2 (+ folded eval-mode bn2)
    wt3_ref, bt3_ref,                   # tabular fc3
    wf1i_ref, wf1t_ref, bf1_ref,        # fusion Linear(2+64, 128), split img/tab
    wf2_ref, bf2_ref,                   # fusion Linear(128, num_classes)
    out_ref,
):
    # ---------------- image branch: one tiny (B, Cin*H*W) @ (Cin*H*W, C) matmul ----
    img_feat = jax.nn.sigmoid(_mm(img_ref[...], wimg_ref[...], bimg_ref[...]))

    # ---------------- tabular branch (BN folded into weights; dropout = identity) --
    t = jnp.maximum(_mm(tab_ref[...], wt1_ref[...], bt1_ref[...]), 0.0)   # fc1+bn1+relu
    t = jnp.maximum(_mm(t, wt2_ref[...], bt2_ref[...]), 0.0)              # fc2+bn2+relu
    t = jnp.maximum(_mm(t, wt3_ref[...], bt3_ref[...]), 0.0)              # fc3+relu

    # ---------------- fusion ----------------
    # cat([img_feat, t], dim=1) @ Wf1  ==  img_feat @ Wf1[:C] + t @ Wf1[C:]
    f = jnp.dot(img_feat, wf1i_ref[...], preferred_element_type=jnp.float32)
    f = f + jnp.dot(t, wf1t_ref[...], preferred_element_type=jnp.float32)
    f = jnp.maximum(f + bf1_ref[...], 0.0)                                # ReLU (dropout=id)
    out_ref[...] = jax.nn.sigmoid(_mm(f, wf2_ref[...], bf2_ref[...]))


def multimodal_forward(image, tabular, params):
    """image: (B, Cin, H, W) NCHW float32; tabular: (B, feature_input_dim)."""
    B = image.shape[0]
    C = params["wf2"].shape[1]
    # NCHW flatten is channel-major, matching the row layout of the composed wimg.
    img_flat = image.reshape(B, -1).astype(jnp.float32)

    args = (
        img_flat, tabular.astype(jnp.float32),
        params["wimg"], params["bimg"],
        params["wt1"], params["bt1"],
        params["wt2"], params["bt2"],
        params["wt3"], params["bt3"],
        params["wf1i"], params["wf1t"], params["bf1"],
        params["wf2"], params["bf2"],
    )
    vmem = pl.BlockSpec(memory_space=pltpu.MemorySpace.VMEM)
    return pl.pallas_call(
        multimodal_kernel,
        out_shape=jax.ShapeDtypeStruct((B, C), jnp.float32),
        in_specs=[vmem] * len(args),
        out_specs=vmem,
        # Honest VMEM budget: total footprint (inputs + ~0.25 MB of weights +
        # activations) is well under 1 MiB; 8 MiB leaves ample compiler headroom
        # on every generation (v5e/v6e 128 MiB, v7x 64 MiB physical VMEM).
        compiler_params=pltpu.CompilerParams(vmem_limit_bytes=8 * 1024 * 1024),
    )(*args)


def init_params(key, feature_input_dim, num_classes, img_shape):
    """Deterministic, PyTorch-like uniform(-1/sqrt(fan_in), +1/sqrt(fan_in)) init,
    with all host-side weight composition/folding applied."""
    assert num_classes == 2, "fusion layer is nn.Linear(2 + 64, 128) -> num_classes must be 2"
    Cin, H, W = img_shape
    ks = jax.random.split(key, 12)

    def lin(k, fan_in, fan_out):
        kw, kb = jax.random.split(k)
        lim = 1.0 / jnp.sqrt(fan_in)
        w = jax.random.uniform(kw, (fan_in, fan_out), jnp.float32, -lim, lim)
        b = jax.random.uniform(kb, (1, fan_out), jnp.float32, -lim, lim)
        return w, b

    def conv_center(k, cin, cout, ksz):
        kw, kb = jax.random.split(k)
        fan_in = cin * ksz * ksz
        lim = 1.0 / jnp.sqrt(fan_in)
        w = jax.random.uniform(kw, (cout, cin, ksz, ksz), jnp.float32, -lim, lim)
        b = jax.random.uniform(kb, (1, cout), jnp.float32, -lim, lim)
        # spatial map is 1x1 with zero padding: only the center tap contributes
        return jnp.transpose(w[:, :, ksz // 2, ksz // 2]), b  # (cin, cout), (1, cout)

    p = {}

    # --- image head: backbone proxy (GAP + Linear(Cin,1024)) then the conv chain.
    # There is no activation between these layers in the PyTorch spec, so the whole
    # thing is one affine map — compose it offline into (Cin, C) and a bias.
    wproj, bproj = lin(ks[0], Cin, 1024)                 # backbone proxy
    wc1, bc1 = conv_center(ks[1], 1024, 1024, 3)
    wp1, bp1 = conv_center(ks[2], 1024, 512, 1)
    wc2, bc2 = conv_center(ks[3], 512, 512, 3)
    wp2, bp2 = conv_center(ks[4], 512, 256, 1)
    wfc, bfc = conv_center(ks[5], 256, num_classes, 1)

    W_img, b_img = wproj, bproj
    for wl, bl in ((wc1, bc1), (wp1, bp1), (wc2, bc2), (wp2, bp2), (wfc, bfc)):
        W_img = W_img @ wl
        b_img = b_img @ wl + bl
    # Fold the global-average-pool over H,W into the composed matrix: each channel
    # row is repeated over its H*W pixels and scaled by 1/(H*W).  (Cin*H*W, C) ~ 6 KB.
    p["wimg"] = jnp.repeat(W_img, H * W, axis=0) / float(H * W)
    p["bimg"] = b_img

    # --- AdvancedTabularModel.  Eval-mode BatchNorm (mean=0, var=1, gamma=1,
    # beta=0) is a pure scale by 1/sqrt(1+eps), folded into fc1/fc2.
    eps = 1e-5
    bn_scale = 1.0 / jnp.sqrt(1.0 + eps)
    wt1, bt1 = lin(ks[6], feature_input_dim, 256)
    p["wt1"], p["bt1"] = wt1 * bn_scale, bt1 * bn_scale
    wt2, bt2 = lin(ks[7], 256, 128)
    p["wt2"], p["bt2"] = wt2 * bn_scale, bt2 * bn_scale
    p["wt3"], p["bt3"] = lin(ks[8], 128, 64)

    # --- Fusion layer: Linear(2 + 64, 128) -> ReLU -> Dropout(id) -> Linear(128, C).
    wf1, p["bf1"] = lin(ks[9], num_classes + 64, 128)
    p["wf1i"] = wf1[:num_classes, :]   # multiplies sigmoid(image logits)
    p["wf1t"] = wf1[num_classes:, :]   # multiplies tabular features
    p["wf2"], p["bf2"] = lin(ks[10], 128, num_classes)
    return p


if __name__ == "__main__":
    key = jax.random.PRNGKey(0)
    B, Cin, H, W = 2, 3, 16, 16
    feature_input_dim, num_classes = 32, 2

    kimg, ktab, kparam = jax.random.split(key, 3)
    image = jax.random.normal(kimg, (B, Cin, H, W), jnp.float32)      # NCHW
    tabular = jax.random.normal(ktab, (B, feature_input_dim), jnp.float32)
    params = init_params(kparam, feature_input_dim, num_classes, (Cin, H, W))

    out = multimodal_forward(image, tabular, params)
    out = jax.block_until_ready(out)
    assert out.shape == (B, num_classes)
    assert bool(jnp.all(jnp.isfinite(out)))
    assert bool(jnp.all((out >= 0.0) & (out <= 1.0)))   # sigmoid output range
    print("KERNEL_OK")
</pallas_src>

<mosaic_0001>
module attributes {stable_mosaic.version = 11 : i64} {
  func.func @multimodal_kernel(%arg0: memref<2x768xf32, #tpu.memory_space<vmem>>, %arg1: memref<2x32xf32, #tpu.memory_space<vmem>>, %arg2: memref<768x2xf32, #tpu.memory_space<vmem>>, %arg3: memref<1x2xf32, #tpu.memory_space<vmem>>, %arg4: memref<32x256xf32, #tpu.memory_space<vmem>>, %arg5: memref<1x256xf32, #tpu.memory_space<vmem>>, %arg6: memref<256x128xf32, #tpu.memory_space<vmem>>, %arg7: memref<1x128xf32, #tpu.memory_space<vmem>>, %arg8: memref<128x64xf32, #tpu.memory_space<vmem>>, %arg9: memref<1x64xf32, #tpu.memory_space<vmem>>, %arg10: memref<2x128xf32, #tpu.memory_space<vmem>>, %arg11: memref<64x128xf32, #tpu.memory_space<vmem>>, %arg12: memref<1x128xf32, #tpu.memory_space<vmem>>, %arg13: memref<128x2xf32, #tpu.memory_space<vmem>>, %arg14: memref<1x2xf32, #tpu.memory_space<vmem>>, %arg15: memref<2x2xf32, #tpu.memory_space<vmem>>) attributes {dimension_semantics = [], scalar_prefetch = 0 : i64, scratch_operands = 0 : i64, tpu.core_type = #tpu.core_type<tc>} {
    %c0 = arith.constant 0 : index
    %c0_0 = arith.constant 0 : index
    %0 = vector.load %arg0[%c0, %c0_0] : memref<2x768xf32, #tpu.memory_space<vmem>>, vector<2x768xf32>
    %c0_1 = arith.constant 0 : index
    %c0_2 = arith.constant 0 : index
    %1 = vector.load %arg2[%c0_1, %c0_2] : memref<768x2xf32, #tpu.memory_space<vmem>>, vector<768x2xf32>
    %c0_3 = arith.constant 0 : index
    %c0_4 = arith.constant 0 : index
    %2 = vector.load %arg3[%c0_3, %c0_4] : memref<1x2xf32, #tpu.memory_space<vmem>>, vector<1x2xf32>
    %cst = arith.constant dense<0.000000e+00> : vector<2x2xf32>
    %3 = tpu.matmul %0, %1, %cst {dimension_numbers = #tpu.dot_dimension_numbers<[1], [0], [0], [1], [0, 0, 1, 1], [], []>} : vector<2x768xf32>, vector<768x2xf32>, vector<2x2xf32> -> vector<2x2xf32>
    %4 = vector.broadcast %2 : vector<1x2xf32> to vector<2x2xf32>
    %5 = arith.addf %3, %4 : vector<2x2xf32>
    %6 = arith.negf %5 : vector<2x2xf32>
    %7 = math.exp %6 : vector<2x2xf32>
    %cst_5 = arith.constant 1.000000e+00 : f32
    %8 = vector.broadcast %cst_5 : f32 to vector<2x2xf32>
    %9 = arith.addf %8, %7 : vector<2x2xf32>
    %10 = arith.divf %8, %9 : vector<2x2xf32>
    %c0_6 = arith.constant 0 : index
    %c0_7 = arith.constant 0 : index
    %11 = vector.load %arg1[%c0_6, %c0_7] : memref<2x32xf32, #tpu.memory_space<vmem>>, vector<2x32xf32>
    %c0_8 = arith.constant 0 : index
    %c0_9 = arith.constant 0 : index
    %12 = vector.load %arg4[%c0_8, %c0_9] : memref<32x256xf32, #tpu.memory_space<vmem>>, vector<32x256xf32>
    %c0_10 = arith.constant 0 : index
    %c0_11 = arith.constant 0 : index
    %13 = vector.load %arg5[%c0_10, %c0_11] : memref<1x256xf32, #tpu.memory_space<vmem>>, vector<1x256xf32>
    %cst_12 = arith.constant dense<0.000000e+00> : vector<2x256xf32>
    %14 = tpu.matmul %11, %12, %cst_12 {dimension_numbers = #tpu.dot_dimension_numbers<[1], [0], [0], [1], [0, 0, 1, 1], [], []>} : vector<2x32xf32>, vector<32x256xf32>, vector<2x256xf32> -> vector<2x256xf32>
    %15 = vector.broadcast %13 : vector<1x256xf32> to vector<2x256xf32>
    %16 = arith.addf %14, %15 : vector<2x256xf32>
    %cst_13 = arith.constant 0.000000e+00 : f32
    %17 = vector.broadcast %cst_13 : f32 to vector<2x256xf32>
    %18 = arith.maximumf %16, %17 : vector<2x256xf32>
    %c0_14 = arith.constant 0 : index
    %c0_15 = arith.constant 0 : index
    %19 = vector.load %arg6[%c0_14, %c0_15] : memref<256x128xf32, #tpu.memory_space<vmem>>, vector<256x128xf32>
    %c0_16 = arith.constant 0 : index
    %c0_17 = arith.constant 0 : index
    %20 = vector.load %arg7[%c0_16, %c0_17] : memref<1x128xf32, #tpu.memory_space<vmem>>, vector<1x128xf32>
    %cst_18 = arith.constant dense<0.000000e+00> : vector<2x128xf32>
    %21 = tpu.matmul %18, %19, %cst_18 {dimension_numbers = #tpu.dot_dimension_numbers<[1], [0], [0], [1], [0, 0, 1, 1], [], []>} : vector<2x256xf32>, vector<256x128xf32>, vector<2x128xf32> -> vector<2x128xf32>
    %22 = vector.broadcast %20 : vector<1x128xf32> to vector<2x128xf32>
    %23 = arith.addf %21, %22 : vector<2x128xf32>
    %cst_19 = arith.constant 0.000000e+00 : f32
    %24 = vector.broadcast %cst_19 : f32 to vector<2x128xf32>
    %25 = arith.maximumf %23, %24 : vector<2x128xf32>
    %c0_20 = arith.constant 0 : index
    %c0_21 = arith.constant 0 : index
    %26 = vector.load %arg8[%c0_20, %c0_21] : memref<128x64xf32, #tpu.memory_space<vmem>>, vector<128x64xf32>
    %c0_22 = arith.constant 0 : index
    %c0_23 = arith.constant 0 : index
    %27 = vector.load %arg9[%c0_22, %c0_23] : memref<1x64xf32, #tpu.memory_space<vmem>>, vector<1x64xf32>
    %cst_24 = arith.constant dense<0.000000e+00> : vector<2x64xf32>
    %28 = tpu.matmul %25, %26, %cst_24 {dimension_numbers = #tpu.dot_dimension_numbers<[1], [0], [0], [1], [0, 0, 1, 1], [], []>} : vector<2x128xf32>, vector<128x64xf32>, vector<2x64xf32> -> vector<2x64xf32>
    %29 = vector.broadcast %27 : vector<1x64xf32> to vector<2x64xf32>
    %30 = arith.addf %28, %29 : vector<2x64xf32>
    %cst_25 = arith.constant 0.000000e+00 : f32
    %31 = vector.broadcast %cst_25 : f32 to vector<2x64xf32>
    %32 = arith.maximumf %30, %31 : vector<2x64xf32>
    %c0_26 = arith.constant 0 : index
    %c0_27 = arith.constant 0 : index
    %33 = vector.load %arg10[%c0_26, %c0_27] : memref<2x128xf32, #tpu.memory_space<vmem>>, vector<2x128xf32>
    %cst_28 = arith.constant dense<0.000000e+00> : vector<2x128xf32>
    %34 = tpu.matmul %10, %33, %cst_28 {dimension_numbers = #tpu.dot_dimension_numbers<[1], [0], [0], [1], [0, 0, 1, 1], [], []>} : vector<2x2xf32>, vector<2x128xf32>, vector<2x128xf32> -> vector<2x128xf32>
    %c0_29 = arith.constant 0 : index
    %c0_30 = arith.constant 0 : index
    %35 = vector.load %arg11[%c0_29, %c0_30] : memref<64x128xf32, #tpu.memory_space<vmem>>, vector<64x128xf32>
    %cst_31 = arith.constant dense<0.000000e+00> : vector<2x128xf32>
    %36 = tpu.matmul %32, %35, %cst_31 {dimension_numbers = #tpu.dot_dimension_numbers<[1], [0], [0], [1], [0, 0, 1, 1], [], []>} : vector<2x64xf32>, vector<64x128xf32>, vector<2x128xf32> -> vector<2x128xf32>
    %37 = arith.addf %34, %36 : vector<2x128xf32>
    %c0_32 = arith.constant 0 : index
    %c0_33 = arith.constant 0 : index
    %38 = vector.load %arg12[%c0_32, %c0_33] : memref<1x128xf32, #tpu.memory_space<vmem>>, vector<1x128xf32>
    %39 = vector.broadcast %38 : vector<1x128xf32> to vector<2x128xf32>
    %40 = arith.addf %37, %39 : vector<2x128xf32>
    %cst_34 = arith.constant 0.000000e+00 : f32
    %41 = vector.broadcast %cst_34 : f32 to vector<2x128xf32>
    %42 = arith.maximumf %40, %41 : vector<2x128xf32>
    %c0_35 = arith.constant 0 : index
    %c0_36 = arith.constant 0 : index
    %43 = vector.load %arg13[%c0_35, %c0_36] : memref<128x2xf32, #tpu.memory_space<vmem>>, vector<128x2xf32>
    %c0_37 = arith.constant 0 : index
    %c0_38 = arith.constant 0 : index
    %44 = vector.load %arg14[%c0_37, %c0_38] : memref<1x2xf32, #tpu.memory_space<vmem>>, vector<1x2xf32>
    %cst_39 = arith.constant dense<0.000000e+00> : vector<2x2xf32>
    %45 = tpu.matmul %42, %43, %cst_39 {dimension_numbers = #tpu.dot_dimension_numbers<[1], [0], [0], [1], [0, 0, 1, 1], [], []>} : vector<2x128xf32>, vector<128x2xf32>, vector<2x2xf32> -> vector<2x2xf32>
    %46 = vector.broadcast %44 : vector<1x2xf32> to vector<2x2xf32>
    %47 = arith.addf %45, %46 : vector<2x2xf32>
    %48 = arith.negf %47 : vector<2x2xf32>
    %49 = math.exp %48 : vector<2x2xf32>
    %cst_40 = arith.constant 1.000000e+00 : f32
    %50 = vector.broadcast %cst_40 : f32 to vector<2x2xf32>
    %51 = arith.addf %50, %49 : vector<2x2xf32>
    %52 = arith.divf %50, %51 : vector<2x2xf32>
    %c0_41 = arith.constant 0 : index
    %c0_42 = arith.constant 0 : index
    %53 = vector.load %arg15[%c0_41, %c0_42] : memref<2x2xf32, #tpu.memory_space<vmem>>, vector<2x2xf32>
    tpu.vector_store %arg15[%c0_41, %c0_42], %52 {strides = array<i32>} : memref<2x2xf32, #tpu.memory_space<vmem>>, vector<2x2xf32>,
    return
  }
}

</mosaic_0001>

<llo_original>
// kernel: tpu_custom_call.1
$region0: #{tpu_custom_call.1}
  #allocation0 [shape = 'u32[]', space=smem, size = 0x4, offset = 0x4, fixed_abs, tag = 'smem constant byte address 0x4 - core index']
  #allocation1 [shape = 'u32[144,128]{1,0:T(1,128)}', space=vmem, size = 0x12000, scoped, tag = 'internal scratch']
  %s0 = inlined_call_operand.vmem [shape: f32[2,768], index: 0, kind: input, shape index: {}]
  %s1 = inlined_call_operand.vmem [shape: f32[2,32], index: 1, kind: input, shape index: {}]
  %s2 = inlined_call_operand.vmem [shape: f32[768,2], index: 2, kind: input, shape index: {}]
  %s3 = inlined_call_operand.vmem [shape: f32[1,2], index: 3, kind: input, shape index: {}]
  %s4 = inlined_call_operand.vmem [shape: f32[32,256], index: 4, kind: input, shape index: {}]
  %s5 = inlined_call_operand.vmem [shape: f32[1,256], index: 5, kind: input, shape index: {}]
  %s6 = inlined_call_operand.vmem [shape: f32[256,128], index: 6, kind: input, shape index: {}]
  %s7 = inlined_call_operand.vmem [shape: f32[1,128], index: 7, kind: input, shape index: {}]
  %s8 = inlined_call_operand.vmem [shape: f32[128,64], index: 8, kind: input, shape index: {}]
  %s9 = inlined_call_operand.vmem [shape: f32[1,64], index: 9, kind: input, shape index: {}]
  %s10 = inlined_call_operand.vmem [shape: f32[2,128], index: 10, kind: input, shape index: {}]
  %s11 = inlined_call_operand.vmem [shape: f32[64,128], index: 11, kind: input, shape index: {}]
  %s12 = inlined_call_operand.vmem [shape: f32[1,128], index: 12, kind: input, shape index: {}]
  %s13 = inlined_call_operand.vmem [shape: f32[128,2], index: 13, kind: input, shape index: {}]
  %s14 = inlined_call_operand.vmem [shape: f32[1,2], index: 14, kind: input, shape index: {}]
  %s15 = inlined_call_operand.hbm [shape: f32[2,2], index: 15, kind: output, shape index: {}]
  %s16 = sld [smem:[#allocation0]]
  $region70: #{tpu_custom_call.1} parent=0
    _
  %s18 = ssub.s32 1, %s16
  %s19 = scalar_select 0, %s18, %s16
  $region1: #{tpu_custom_call.1} parent=0
    #allocation2 [shape = 'u8[1024]{0}', space=vmem, size = 0x400, scoped, tag = 'output window, operand 0, single buffered']
    #allocation3 [shape = 's32[1]{0}', space=sflag, size = 0x4, scoped, tag = 'scoped memory for tpu_custom_call.1']
    %20 = vsyncpa [#allocation3], 0
    // Predicated region
    $region2: #{tpu_custom_call.1} parent=1 // pred_check
      _
    $region3: #{tpu_custom_call.1} parent=1 // pred_check_branch
      %22 = sbr.rel (0) target = $region5
    $region4: #{tpu_custom_call.1} parent=1 // pred_region
      _
    $region5: #{tpu_custom_call.1} parent=1 // pred_fallthru
      _
    // Predicated region
    $region6: #{tpu_custom_call.1} parent=1 // pred_check
      _
    $region7: #{tpu_custom_call.1} parent=1 // pred_check_branch
      %24 = sbr.rel (0) target = $region9
    $region8: #{tpu_custom_call.1} parent=1 // pred_region
      _
    $region9: #{tpu_custom_call.1} parent=1 // pred_fallthru
      _
    // Predicated region
    $region10: #{tpu_custom_call.1} parent=1 // pred_check
      _
    $region11: #{tpu_custom_call.1} parent=1 // pred_check_branch
      %26 = sbr.rel (0) target = $region13
    $region12: #{tpu_custom_call.1} parent=1 // pred_region
      _
    $region13: #{tpu_custom_call.1} parent=1 // pred_fallthru
      _
    // Predicated region
    $region14: #{tpu_custom_call.1} parent=1 // pred_check
      _
    $region15: #{tpu_custom_call.1} parent=1 // pred_check_branch
      %28 = sbr.rel (0) target = $region17
    $region16: #{tpu_custom_call.1} parent=1 // pred_region
      _
    $region17: #{tpu_custom_call.1} parent=1 // pred_fallthru
      _
    // Predicated region
    $region18: #{tpu_custom_call.1} parent=1 // pred_check
      _
    $region19: #{tpu_custom_call.1} parent=1 // pred_check_branch
      %30 = sbr.rel (0) target = $region21
    $region20: #{tpu_custom_call.1} parent=1 // pred_region
      _
    $region21: #{tpu_custom_call.1} parent=1 // pred_fallthru
      _
    // Predicated region
    $region22: #{tpu_custom_call.1} parent=1 // pred_check
      _
    $region23: #{tpu_custom_call.1} parent=1 // pred_check_branch
      %32 = sbr.rel (0) target = $region25
    $region24: #{tpu_custom_call.1} parent=1 // pred_region
      _
    $region25: #{tpu_custom_call.1} parent=1 // pred_fallthru
      _
    // Predicated region
    $region26: #{tpu_custom_call.1} parent=1 // pred_check
      _
    $region27: #{tpu_custom_call.1} parent=1 // pred_check_branch
      %34 = sbr.rel (0) target = $region29
    $region28: #{tpu_custom_call.1} parent=1 // pred_region
      _
    $region29: #{tpu_custom_call.1} parent=1 // pred_fallthru
      _
    // Predicated region
    $region30: #{tpu_custom_call.1} parent=1 // pred_check
      _
    $region31: #{tpu_custom_call.1} parent=1 // pred_check_branch
      %36 = sbr.rel (0) target = $region33
    $region32: #{tpu_custom_call.1} parent=1 // pred_region
      _
    $region33: #{tpu_custom_call.1} parent=1 // pred_fallthru
      _
    // Predicated region
    $region34: #{tpu_custom_call.1} parent=1 // pred_check
      _
    $region35: #{tpu_custom_call.1} parent=1 // pred_check_branch
      %38 = sbr.rel (0) target = $region37
    $region36: #{tpu_custom_call.1} parent=1 // pred_region
      _
    $region37: #{tpu_custom_call.1} parent=1 // pred_fallthru
      _
    // Predicated region
    $region38: #{tpu_custom_call.1} parent=1 // pred_check
      _
    $region39: #{tpu_custom_call.1} parent=1 // pred_check_branch
      %40 = sbr.rel (0) target = $region41
    $region40: #{tpu_custom_call.1} parent=1 // pred_region
      _
    $region41: #{tpu_custom_call.1} parent=1 // pred_fallthru
      _
    // Predicated region
    $region42: #{tpu_custom_call.1} parent=1 // pred_check
      _
    $region43: #{tpu_custom_call.1} parent=1 // pred_check_branch
      %42 = sbr.rel (0) target = $region45
    $region44: #{tpu_custom_call.1} parent=1 // pred_region
      _
    $region45: #{tpu_custom_call.1} parent=1 // pred_fallthru
      _
    // Predicated region
    $region46: #{tpu_custom_call.1} parent=1 // pred_check
      _
    $region47: #{tpu_custom_call.1} parent=1 // pred_check_branch
      %44 = sbr.rel (0) target = $region49
    $region48: #{tpu_custom_call.1} parent=1 // pred_region
      _
    $region49: #{tpu_custom_call.1} parent=1 // pred_fallthru
      _
    // Predicated region
    $region50: #{tpu_custom_call.1} parent=1 // pred_check
      _
    $region51: #{tpu_custom_call.1} parent=1 // pred_check_branch
      %46 = sbr.rel (0) target = $region53
    $region52: #{tpu_custom_call.1} parent=1 // pred_region
      _
    $region53: #{tpu_custom_call.1} parent=1 // pred_fallthru
      _
    // Predicated region
    $region54: #{tpu_custom_call.1} parent=1 // pred_check
      _
    $region55: #{tpu_custom_call.1} parent=1 // pred_check_branch
      %48 = sbr.rel (0) target = $region57
    $region56: #{tpu_custom_call.1} parent=1 // pred_region
      _
    $region57: #{tpu_custom_call.1} parent=1 // pred_fallthru
      _
    // Predicated region
    $region58: #{tpu_custom_call.1} parent=1 // pred_check
      _
    $region59: #{tpu_custom_call.1} parent=1 // pred_check_branch
      %50 = sbr.rel (0) target = $region61
    $region60: #{tpu_custom_call.1} parent=1 // pred_region
      _
    $region61: #{tpu_custom_call.1} parent=1 // pred_fallthru
      _
    %v51 = vld [vmem:[%s0] sm:$0xff]
    %v52 = vld [vmem:[%s0 + $0x8] sm:$0xf]
    %v53 = vld [vmem:[%s2] sm:$0xff]
    %v54 = vld [vmem:[%s2 + $0x8] sm:$0xff]
    %v55 = vld [vmem:[%s2 + $0x10] sm:$0xff]
    %v56 = vld [vmem:[%s2 + $0x18] sm:$0xff]
    %v57 = vld [vmem:[%s2 + $0x20] sm:$0xff]
    %v58 = vld [vmem:[%s2 + $0x28] sm:$0xff]
    %v59 = vld [vmem:[%s2 + $0x30] sm:$0xff]
    %v60 = vld [vmem:[%s2 + $0x38] sm:$0xff]
    %v61 = vld [vmem:[%s2 + $0x40] sm:$0xff]
    %v62 = vld [vmem:[%s2 + $0x48] sm:$0xff]
    %v63 = vld [vmem:[%s2 + $0x50] sm:$0xff]
    %v64 = vld [vmem:[%s2 + $0x58] sm:$0xff]
    %v65 = vld [vmem:[%s2 + $0x60] sm:$0xff]
    %v66 = vld [vmem:[%s2 + $0x68] sm:$0xff]
    %v67 = vld [vmem:[%s2 + $0x70] sm:$0xff]
    %v68 = vld [vmem:[%s2 + $0x78] sm:$0xff]
    %v69 = vld [vmem:[%s2 + $0x80] sm:$0xff]
    %v70 = vld [vmem:[%s2 + $0x88] sm:$0xff]
    %v71 = vld [vmem:[%s2 + $0x90] sm:$0xff]
    %v72 = vld [vmem:[%s2 + $0x98] sm:$0xff]
    %v73 = vld [vmem:[%s2 + $0xa0] sm:$0xff]
    %v74 = vld [vmem:[%s2 + $0xa8] sm:$0xff]
    %v75 = vld [vmem:[%s2 + $0xb0] sm:$0xff]
    %v76 = vld [vmem:[%s2 + $0xb8] sm:$0xff]
    %v77 = vld [vmem:[%s2 + $0xc0] sm:$0xff]
    %v78 = vld [vmem:[%s2 + $0xc8] sm:$0xff]
    %v79 = vld [vmem:[%s2 + $0xd0] sm:$0xff]
    %v80 = vld [vmem:[%s2 + $0xd8] sm:$0xff]
    %v81 = vld [vmem:[%s2 + $0xe0] sm:$0xff]
    %v82 = vld [vmem:[%s2 + $0xe8] sm:$0xff]
    %v83 = vld [vmem:[%s2 + $0xf0] sm:$0xff]
    %v84 = vld [vmem:[%s2 + $0xf8] sm:$0xff]
    %v85 = vld [vmem:[%s2 + $0x100] sm:$0xff]
    %v86 = vld [vmem:[%s2 + $0x108] sm:$0xff]
    %v87 = vld [vmem:[%s2 + $0x110] sm:$0xff]
    %v88 = vld [vmem:[%s2 + $0x118] sm:$0xff]
    %v89 = vld [vmem:[%s2 + $0x120] sm:$0xff]
    %v90 = vld [vmem:[%s2 + $0x128] sm:$0xff]
    %v91 = vld [vmem:[%s2 + $0x130] sm:$0xff]
    %v92 = vld [vmem:[%s2 + $0x138] sm:$0xff]
    %v93 = vld [vmem:[%s2 + $0x140] sm:$0xff]
    %v94 = vld [vmem:[%s2 + $0x148] sm:$0xff]
    %v95 = vld [vmem:[%s2 + $0x150] sm:$0xff]
    %v96 = vld [vmem:[%s2 + $0x158] sm:$0xff]
    %v97 = vld [vmem:[%s2 + $0x160] sm:$0xff]
    %v98 = vld [vmem:[%s2 + $0x168] sm:$0xff]
    %v99 = vld [vmem:[%s2 + $0x170] sm:$0xff]
    %v100 = vld [vmem:[%s2 + $0x178] sm:$0xff]
    %v101 = vld [vmem:[%s2 + $0x180] sm:$0xff]
    %v102 = vld [vmem:[%s2 + $0x188] sm:$0xff]
    %v103 = vld [vmem:[%s2 + $0x190] sm:$0xff]
    %v104 = vld [vmem:[%s2 + $0x198] sm:$0xff]
    %v105 = vld [vmem:[%s2 + $0x1a0] sm:$0xff]
    %v106 = vld [vmem:[%s2 + $0x1a8] sm:$0xff]
    %v107 = vld [vmem:[%s2 + $0x1b0] sm:$0xff]
    %v108 = vld [vmem:[%s2 + $0x1b8] sm:$0xff]
    %v109 = vld [vmem:[%s2 + $0x1c0] sm:$0xff]
    %v110 = vld [vmem:[%s2 + $0x1c8] sm:$0xff]
    %v111 = vld [vmem:[%s2 + $0x1d0] sm:$0xff]
    %v112 = vld [vmem:[%s2 + $0x1d8] sm:$0xff]
    %v113 = vld [vmem:[%s2 + $0x1e0] sm:$0xff]
    %v114 = vld [vmem:[%s2 + $0x1e8] sm:$0xff]
    %v115 = vld [vmem:[%s2 + $0x1f0] sm:$0xff]
    %v116 = vld [vmem:[%s2 + $0x1f8] sm:$0xff]
    %v117 = vld [vmem:[%s2 + $0x200] sm:$0xff]
    %v118 = vld [vmem:[%s2 + $0x208] sm:$0xff]
    %v119 = vld [vmem:[%s2 + $0x210] sm:$0xff]
    %v120 = vld [vmem:[%s2 + $0x218] sm:$0xff]
    %v121 = vld [vmem:[%s2 + $0x220] sm:$0xff]
    %v122 = vld [vmem:[%s2 + $0x228] sm:$0xff]
    %v123 = vld [vmem:[%s2 + $0x230] sm:$0xff]
    %v124 = vld [vmem:[%s2 + $0x238] sm:$0xff]
    %v125 = vld [vmem:[%s2 + $0x240] sm:$0xff]
    %v126 = vld [vmem:[%s2 + $0x248] sm:$0xff]
    %v127 = vld [vmem:[%s2 + $0x250] sm:$0xff]
    %v128 = vld [vmem:[%s2 + $0x258] sm:$0xff]
    %v129 = vld [vmem:[%s2 + $0x260] sm:$0xff]
    %v130 = vld [vmem:[%s2 + $0x268] sm:$0xff]
    %v131 = vld [vmem:[%s2 + $0x270] sm:$0xff]
    %v132 = vld [vmem:[%s2 + $0x278] sm:$0xff]
    %v133 = vld [vmem:[%s2 + $0x280] sm:$0xff]
    %v134 = vld [vmem:[%s2 + $0x288] sm:$0xff]
    %v135 = vld [vmem:[%s2 + $0x290] sm:$0xff]
    %v136 = vld [vmem:[%s2 + $0x298] sm:$0xff]
    %v137 = vld [vmem:[%s2 + $0x2a0] sm:$0xff]
    %v138 = vld [vmem:[%s2 + $0x2a8] sm:$0xff]
    %v139 = vld [vmem:[%s2 + $0x2b0] sm:$0xff]
    %v140 = vld [vmem:[%s2 + $0x2b8] sm:$0xff]
    %v141 = vld [vmem:[%s2 + $0x2c0] sm:$0xff]
    %v142 = vld [vmem:[%s2 + $0x2c8] sm:$0xff]
    %v143 = vld [vmem:[%s2 + $0x2d0] sm:$0xff]
    %v144 = vld [vmem:[%s2 + $0x2d8] sm:$0xff]
    %v145 = vld [vmem:[%s2 + $0x2e0] sm:$0xff]
    %v146 = vld [vmem:[%s2 + $0x2e8] sm:$0xff]
    %v147 = vld [vmem:[%s2 + $0x2f0] sm:$0xff]
    %v148 = vld [vmem:[%s2 + $0x2f8] sm:$0xff]
    %v149 = vld [vmem:[%s3] sm:$0x1]
    %v151 = vlaneseq
    %v152 = vshrl.u32 %v151, 7
    %v153 = vsub.s32 0, %v152
    %v154 = vrot.slane %v149, %v153
    %v158 = vcombine.high %v51, %v51
    %v160 = vunpack.c.l.s4 1983009808
    %v161 = vunpack.c.0.s8 %v160
    %v162 = vlaneseq
    %v163 = vshrl.u32 %v162, 7
    %v164 = vsub.s32 %v161, %v163
    %v165 = vrot.slane %v51, %v164
    %v167 = vunpack.c.l.s4 1983009808
    %v168 = vunpack.c.0.s8 %v167
    %v169 = vlaneseq
    %v170 = vshrl.u32 %v169, 7
    %v171 = vsub.s32 %v168, %v170
    %v172 = vrot.slane %v158, %v171
    %v173 = vcombine.high %v165, %v165
    %v174 = vcombine.high %v172, %v172
    %v176 = vunpack.c.l.s4 1983009808
    %v177 = vunpack.c.0.s8 %v176
    %v178 = vlaneseq
    %v179 = vshrl.u32 %v178, 7
    %v180 = vsub.s32 %v177, %v179
    %v181 = vrot.slane %v52, %v180
    %v182 = vcombine.high %v181, %v181
    %189 = vmatprep.subr.mxu0 0.0
    %190 = vmatpush1.msra.mxu0 %v68
    %191 = vmatprep.subr.mxu0 0.0
    %192 = vmatpush1.msra.mxu0 %v67
    %193 = vmatprep.subr.mxu0 0.0
    %194 = vmatpush1.msra.mxu0 %v66
    %195 = vmatprep.subr.mxu0 0.0
    %196 = vmatpush1.msra.mxu0 %v65
    %197 = vmatprep.subr.mxu0 0.0
    %198 = vmatpush1.msra.mxu0 %v64
    %199 = vmatprep.subr.mxu0 0.0
    %200 = vmatpush1.msra.mxu0 %v63
    %201 = vmatprep.subr.mxu0 0.0
    %202 = vmatpush1.msra.mxu0 %v62
    %203 = vmatprep.subr.mxu0 0.0
    %204 = vmatpush1.msra.mxu0 %v61
    %205 = vmatprep.subr.mxu0 0.0
    %206 = vmatpush1.msra.mxu0 %v60
    %207 = vmatprep.subr.mxu0 0.0
    %208 = vmatpush1.msra.mxu0 %v59
    %209 = vmatprep.subr.mxu0 0.0
    %210 = vmatpush1.msra.mxu0 %v58
    %211 = vmatprep.subr.mxu0 0.0
    %212 = vmatpush1.msra.mxu0 %v57
    %213 = vmatprep.subr.mxu0 0.0
    %214 = vmatpush1.msra.mxu0 %v56
    %215 = vmatprep.subr.mxu0 0.0
    %216 = vmatpush1.msra.mxu0 %v55
    %217 = vmatprep.subr.mxu0 0.0
    %218 = vmatpush1.msra.mxu0 %v54
    %219 = vmatprep.subr.mxu0 0.0
    %220 = vmatpush1.msra.mxu0 %v53
    %221 = vmatprep.subr.mxu0 0.0
    %222 = vmatpush2.msra.mxu0 %v84
    %223 = vmatprep.subr.mxu0 0.0
    %224 = vmatpush2.msra.mxu0 %v83
    %225 = vmatprep.subr.mxu0 0.0
    %226 = vmatpush2.msra.mxu0 %v82
    %227 = vmatprep.subr.mxu0 0.0
    %228 = vmatpush2.msra.mxu0 %v81
    %229 = vmatprep.subr.mxu0 0.0
    %230 = vmatpush2.msra.mxu0 %v80
    %231 = vmatprep.subr.mxu0 0.0
    %232 = vmatpush2.msra.mxu0 %v79
    %233 = vmatprep.subr.mxu0 0.0
    %234 = vmatpush2.msra.mxu0 %v78
    %235 = vmatprep.subr.mxu0 0.0
    %236 = vmatpush2.msra.mxu0 %v77
    %237 = vmatprep.subr.mxu0 0.0
    %238 = vmatpush2.msra.mxu0 %v76
    %239 = vmatprep.subr.mxu0 0.0
    %240 = vmatpush2.msra.mxu0 %v75
    %241 = vmatprep.subr.mxu0 0.0
    %242 = vmatpush2.msra.mxu0 %v74
    %243 = vmatprep.subr.mxu0 0.0
    %244 = vmatpush2.msra.mxu0 %v73
    %245 = vmatprep.subr.mxu0 0.0
    %246 = vmatpush2.msra.mxu0 %v72
    %247 = vmatprep.subr.mxu0 0.0
    %248 = vmatpush2.msra.mxu0 %v71
    %249 = vmatprep.subr.mxu0 0.0
    %250 = vmatpush2.msra.mxu0 %v70
    %251 = vmatprep.subr.mxu0 0.0
    %252 = vmatpush2.msra.mxu0 %v69
    %253 = vmatprep.mubr.f32.mxu0 %v173
    %254 = vmatmul.mubr.f32.gmra.mxu0 %v165
    %v255 = vpop.f32.mrf.mxu0
    %v256 = vadd.f32 %v154, %v255
    %v257 = vpop.f32.mrf.mxu0
    %258 = vdwg.mxu0
    %259 = vmatprep.subr.mxu0 0.0
    %260 = vmatpush1.msra.mxu0 %v100
    %261 = vmatprep.subr.mxu0 0.0
    %262 = vmatpush1.msra.mxu0 %v99
    %263 = vmatprep.subr.mxu0 0.0
    %264 = vmatpush1.msra.mxu0 %v98
    %265 = vmatprep.subr.mxu0 0.0
    %266 = vmatpush1.msra.mxu0 %v97
    %267 = vmatprep.subr.mxu0 0.0
    %268 = vmatpush1.msra.mxu0 %v96
    %269 = vmatprep.subr.mxu0 0.0
    %270 = vmatpush1.msra.mxu0 %v95
    %271 = vmatprep.subr.mxu0 0.0
    %272 = vmatpush1.msra.mxu0 %v94
    %273 = vmatprep.subr.mxu0 0.0
    %274 = vmatpush1.msra.mxu0 %v93
    %275 = vmatprep.subr.mxu0 0.0
    %276 = vmatpush1.msra.mxu0 %v92
    %277 = vmatprep.subr.mxu0 0.0
    %278 = vmatpush1.msra.mxu0 %v91
    %279 = vmatprep.subr.mxu0 0.0
    %280 = vmatpush1.msra.mxu0 %v90
    %281 = vmatprep.subr.mxu0 0.0
    %282 = vmatpush1.msra.mxu0 %v89
    %283 = vmatprep.subr.mxu0 0.0
    %284 = vmatpush1.msra.mxu0 %v88
    %285 = vmatprep.subr.mxu0 0.0
    %286 = vmatpush1.msra.mxu0 %v87
    %287 = vmatprep.subr.mxu0 0.0
    %288 = vmatpush1.msra.mxu0 %v86
    %289 = vmatprep.subr.mxu0 0.0
    %290 = vmatpush1.msra.mxu0 %v85
    %291 = vmatprep.subr.mxu0 0.0
    %292 = vmatpush2.msra.mxu0 %v116
    %293 = vmatprep.subr.mxu0 0.0
    %294 = vmatpush2.msra.mxu0 %v115
    %295 = vmatprep.subr.mxu0 0.0
    %296 = vmatpush2.msra.mxu0 %v114
    %297 = vmatprep.subr.mxu0 0.0
    %298 = vmatpush2.msra.mxu0 %v113
    %299 = vmatprep.subr.mxu0 0.0
    %300 = vmatpush2.msra.mxu0 %v112
    %301 = vmatprep.subr.mxu0 0.0
    %302 = vmatpush2.msra.mxu0 %v111
    %303 = vmatprep.subr.mxu0 0.0
    %304 = vmatpush2.msra.mxu0 %v110
    %305 = vmatprep.subr.mxu0 0.0
    %306 = vmatpush2.msra.mxu0 %v109
    %307 = vmatprep.subr.mxu0 0.0
    %308 = vmatpush2.msra.mxu0 %v108
    %309 = vmatprep.subr.mxu0 0.0
    %310 = vmatpush2.msra.mxu0 %v107
    %311 = vmatprep.subr.mxu0 0.0
    %312 = vmatpush2.msra.mxu0 %v106
    %313 = vmatprep.subr.mxu0 0.0
    %314 = vmatpush2.msra.mxu0 %v105
    %315 = vmatprep.subr.mxu0 0.0
    %316 = vmatpush2.msra.mxu0 %v104
    %317 = vmatprep.subr.mxu0 0.0
    %318 = vmatpush2.msra.mxu0 %v103
    %319 = vmatprep.subr.mxu0 0.0
    %320 = vmatpush2.msra.mxu0 %v102
    %321 = vmatprep.subr.mxu0 0.0
    %322 = vmatpush2.msra.mxu0 %v101
    %323 = vmatprep.mubr.f32.mxu0 %v174
    %324 = vmatmul.mubr.f32.gmra.mxu0 %v172
    %v325 = vpop.f32.mrf.mxu0
    %v326 = vadd.f32 %v256, %v325
    %v327 = vpop.f32.mrf.mxu0
    %328 = vdwg.mxu0
    %329 = vmatprep.subr.mxu0 0.0
    %330 = vmatpush1.msra.mxu0 %v132
    %331 = vmatprep.subr.mxu0 0.0
    %332 = vmatpush1.msra.mxu0 %v131
    %333 = vmatprep.subr.mxu0 0.0
    %334 = vmatpush1.msra.mxu0 %v130
    %335 = vmatprep.subr.mxu0 0.0
    %336 = vmatpush1.msra.mxu0 %v129
    %337 = vmatprep.subr.mxu0 0.0
    %338 = vmatpush1.msra.mxu0 %v128
    %339 = vmatprep.subr.mxu0 0.0
    %340 = vmatpush1.msra.mxu0 %v127
    %341 = vmatprep.subr.mxu0 0.0
    %342 = vmatpush1.msra.mxu0 %v126
    %343 = vmatprep.subr.mxu0 0.0
    %344 = vmatpush1.msra.mxu0 %v125
    %345 = vmatprep.subr.mxu0 0.0
    %346 = vmatpush1.msra.mxu0 %v124
    %347 = vmatprep.subr.mxu0 0.0
    %348 = vmatpush1.msra.mxu0 %v123
    %349 = vmatprep.subr.mxu0 0.0
    %350 = vmatpush1.msra.mxu0 %v122
    %351 = vmatprep.subr.mxu0 0.0
    %352 = vmatpush1.msra.mxu0 %v121
    %353 = vmatprep.subr.mxu0 0.0
    %354 = vmatpush1.msra.mxu0 %v120
    %355 = vmatprep.subr.mxu0 0.0
    %356 = vmatpush1.msra.mxu0 %v119
    %357 = vmatprep.subr.mxu0 0.0
    %358 = vmatpush1.msra.mxu0 %v118
    %359 = vmatprep.subr.mxu0 0.0
    %360 = vmatpush1.msra.mxu0 %v117
    %361 = vmatprep.subr.mxu0 0.0
    %362 = vmatpush2.msra.mxu0 %v148
    %363 = vmatprep.subr.mxu0 0.0
    %364 = vmatpush2.msra.mxu0 %v147
    %365 = vmatprep.subr.mxu0 0.0
    %366 = vmatpush2.msra.mxu0 %v146
    %367 = vmatprep.subr.mxu0 0.0
    %368 = vmatpush2.msra.mxu0 %v145
    %369 = vmatprep.subr.mxu0 0.0
    %370 = vmatpush2.msra.mxu0 %v144
    %371 = vmatprep.subr.mxu0 0.0
    %372 = vmatpush2.msra.mxu0 %v143
    %373 = vmatprep.subr.mxu0 0.0
    %374 = vmatpush2.msra.mxu0 %v142
    %375 = vmatprep.subr.mxu0 0.0
    %376 = vmatpush2.msra.mxu0 %v141
    %377 = vmatprep.subr.mxu0 0.0
    %378 = vmatpush2.msra.mxu0 %v140
    %379 = vmatprep.subr.mxu0 0.0
    %380 = vmatpush2.msra.mxu0 %v139
    %381 = vmatprep.subr.mxu0 0.0
    %382 = vmatpush2.msra.mxu0 %v138
    %383 = vmatprep.subr.mxu0 0.0
    %384 = vmatpush2.msra.mxu0 %v137
    %385 = vmatprep.subr.mxu0 0.0
    %386 = vmatpush2.msra.mxu0 %v136
    %387 = vmatprep.subr.mxu0 0.0
    %388 = vmatpush2.msra.mxu0 %v135
    %389 = vmatprep.subr.mxu0 0.0
    %390 = vmatpush2.msra.mxu0 %v134
    %391 = vmatprep.subr.mxu0 0.0
    %392 = vmatpush2.msra.mxu0 %v133
    %393 = vmatprep.mubr.f32.mxu0 %v182
    %394 = vmatmul.mubr.f32.gmra.mxu0 %v181
    %v395 = vpop.f32.mrf.mxu0
    %v396 = vadd.f32 %v326, %v395
    %v397 = vpop.f32.mrf.mxu0
    %398 = vdwg.mxu0
    %v399 = vxor.u32 %v396, 2147483648
    %v400 = vmul.f32 %v399, 1.442695
    %v401 = vpow.pop %v400
    %v402 = vadd.f32 %v401, 1.0
    %v403 = vrcp.pop %v402
    %v404 = vmul.f32 1.0, %v403
    %v405 = vld [vmem:[%s1] sm:$0x3]
    %v406 = vld [vmem:[%s4] sm:$0xff]
    %v407 = vld [vmem:[%s4 + $0x8] sm:$0xff]
    %v408 = vld [vmem:[%s4 + $0x10] sm:$0xff]
    %v409 = vld [vmem:[%s4 + $0x18] sm:$0xff]
    %v410 = vld [vmem:[%s4 + $0x20] sm:$0xff]
    %v411 = vld [vmem:[%s4 + $0x28] sm:$0xff]
    %v412 = vld [vmem:[%s4 + $0x30] sm:$0xff]
    %v413 = vld [vmem:[%s4 + $0x38] sm:$0xff]
    %v414 = vld [vmem:[%s5] sm:$0x3]
    %v416 = vlaneseq
    %v417 = vshrl.u32 %v416, 7
    %v418 = vsub.s32 0, %v417
    %v419 = vrot.slane %v414, %v418
    %v420 = vlaneseq
    %v421 = vshrl.u32 %v420, 7
    %v422 = vsub.s32 1, %v421
    %v423 = vrot.slane %v414, %v422
    %vm426 = vcmask 261120
    %v428 = vsel %vm426, %v405, 0
    %430 = vmatprep.subr.mxu0 0.0
    %431 = vmatpush1.msra.mxu0 0.0
    %432 = vmatprep.subr.mxu0 0.0
    %433 = vmatpush1.msra.mxu0 0.0
    %434 = vmatprep.subr.mxu0 0.0
    %435 = vmatpush1.msra.mxu0 0.0
    %436 = vmatprep.subr.mxu0 0.0
    %437 = vmatpush1.msra.mxu0 0.0
    %438 = vmatprep.subr.mxu0 0.0
    %439 = vmatpush1.msra.mxu0 0.0
    %440 = vmatprep.subr.mxu0 0.0
    %441 = vmatpush1.msra.mxu0 0.0
    %442 = vmatprep.subr.mxu0 0.0
    %443 = vmatpush1.msra.mxu0 0.0
    %444 = vmatprep.subr.mxu0 0.0
    %445 = vmatpush1.msra.mxu0 0.0
    %446 = vmatprep.subr.mxu0 0.0
    %447 = vmatpush1.msra.mxu0 0.0
    %448 = vmatprep.subr.mxu0 0.0
    %449 = vmatpush1.msra.mxu0 0.0
    %450 = vmatprep.subr.mxu0 0.0
    %451 = vmatpush1.msra.mxu0 0.0
    %452 = vmatprep.subr.mxu0 0.0
    %453 = vmatpush1.msra.mxu0 0.0
    %454 = vmatprep.subr.mxu0 %v413
    %455 = vmatpush1.msra.mxu0 %v412
    %456 = vmatprep.subr.mxu0 %v411
    %457 = vmatpush1.msra.mxu0 %v410
    %458 = vmatprep.subr.mxu0 %v409
    %459 = vmatpush1.msra.mxu0 %v408
    %460 = vmatprep.subr.mxu0 %v407
    %461 = vmatpush1.msra.mxu0 %v406
    %462 = vmatprep.subr.mxu0 0.0
    %463 = vmatpush2.msra.mxu0 0.0
    %464 = vmatprep.subr.mxu0 0.0
    %465 = vmatpush2.msra.mxu0 0.0
    %466 = vmatprep.subr.mxu0 0.0
    %467 = vmatpush2.msra.mxu0 0.0
    %468 = vmatprep.subr.mxu0 0.0
    %469 = vmatpush2.msra.mxu0 0.0
    %470 = vmatprep.subr.mxu0 0.0
    %471 = vmatpush2.msra.mxu0 0.0
    %472 = vmatprep.subr.mxu0 0.0
    %473 = vmatpush2.msra.mxu0 0.0
    %474 = vmatprep.subr.mxu0 0.0
    %475 = vmatpush2.msra.mxu0 0.0
    %476 = vmatprep.subr.mxu0 0.0
    %477 = vmatpush2.msra.mxu0 0.0
    %478 = vmatprep.subr.mxu0 0.0
    %479 = vmatpush2.msra.mxu0 0.0
    %480 = vmatprep.subr.mxu0 0.0
    %481 = vmatpush2.msra.mxu0 0.0
    %482 = vmatprep.subr.mxu0 0.0
    %483 = vmatpush2.msra.mxu0 0.0
    %484 = vmatprep.subr.mxu0 0.0
    %485 = vmatpush2.msra.mxu0 0.0
    %486 = vmatprep.subr.mxu0 0.0
    %487 = vmatpush2.msra.mxu0 0.0
    %488 = vmatprep.subr.mxu0 0.0
    %489 = vmatpush2.msra.mxu0 0.0
    %490 = vmatprep.subr.mxu0 0.0
    %491 = vmatpush2.msra.mxu0 0.0
    %492 = vmatprep.subr.mxu0 0.0
    %493 = vmatpush2.msra.mxu0 0.0
    %494 = vmatprep.mubr.f32.mxu0 0.0
    %495 = vmatmul.mubr.f32.gmra.mxu0 %v428
    %v496 = vpop.f32.mrf.mxu0
    %v497 = vadd.f32 %v419, %v496
    %v498 = vpop.f32.mrf.mxu0
    %v499 = vadd.f32 %v423, %v498
    %500 = vdwg.mxu0
    %v501 = vmax.f32 %v497, 0.0
    %v502 = vmax.f32 %v499, 0.0
    %v503 = vld [vmem:[%s6] sm:$0xff]
    %v504 = vld [vmem:[%s6 + $0x8] sm:$0xff]
    %v505 = vld [vmem:[%s6 + $0x10] sm:$0xff]
    %v506 = vld [vmem:[%s6 + $0x18] sm:$0xff]
    %v507 = vld [vmem:[%s6 + $0x20] sm:$0xff]
    %v508 = vld [vmem:[%s6 + $0x28] sm:$0xff]
    %v509 = vld [vmem:[%s6 + $0x30] sm:$0xff]
    %v510 = vld [vmem:[%s6 + $0x38] sm:$0xff]
    %v511 = vld [vmem:[%s6 + $0x40] sm:$0xff]
    %v512 = vld [vmem:[%s6 + $0x48] sm:$0xff]
    %v513 = vld [vmem:[%s6 + $0x50] sm:$0xff]
    %v514 = vld [vmem:[%s6 + $0x58] sm:$0xff]
    %v515 = vld [vmem:[%s6 + $0x60] sm:$0xff]
    %v516 = vld [vmem:[%s6 + $0x68] sm:$0xff]
    %v517 = vld [vmem:[%s6 + $0x70] sm:$0xff]
    %v518 = vld [vmem:[%s6 + $0x78] sm:$0xff]
    %v519 = vld [vmem:[%s6 + $0x80] sm:$0xff]
    %v520 = vld [vmem:[%s6 + $0x88] sm:$0xff]
    %v521 = vld [vmem:[%s6 + $0x90] sm:$0xff]
    %v522 = vld [vmem:[%s6 + $0x98] sm:$0xff]
    %v523 = vld [vmem:[%s6 + $0xa0] sm:$0xff]
    %v524 = vld [vmem:[%s6 + $0xa8] sm:$0xff]
    %v525 = vld [vmem:[%s6 + $0xb0] sm:$0xff]
    %v526 = vld [vmem:[%s6 + $0xb8] sm:$0xff]
    %v527 = vld [vmem:[%s6 + $0xc0] sm:$0xff]
    %v528 = vld [vmem:[%s6 + $0xc8] sm:$0xff]
    %v529 = vld [vmem:[%s6 + $0xd0] sm:$0xff]
    %v530 = vld [vmem:[%s6 + $0xd8] sm:$0xff]
    %v531 = vld [vmem:[%s6 + $0xe0] sm:$0xff]
    %v532 = vld [vmem:[%s6 + $0xe8] sm:$0xff]
    %v533 = vld [vmem:[%s6 + $0xf0] sm:$0xff]
    %v534 = vld [vmem:[%s6 + $0xf8] sm:$0xff]
    %v535 = vld [vmem:[%s7] sm:$0x1]
    %v537 = vlaneseq
    %v538 = vshrl.u32 %v537, 7
    %v539 = vsub.s32 0, %v538
    %v540 = vrot.slane %v535, %v539
    %542 = vmatprep.subr.mxu0 0.0
    %543 = vmatpush1.msra.mxu0 %v518
    %544 = vmatprep.subr.mxu0 0.0
    %545 = vmatpush1.msra.mxu0 %v517
    %546 = vmatprep.subr.mxu0 0.0
    %547 = vmatpush1.msra.mxu0 %v516
    %548 = vmatprep.subr.mxu0 0.0
    %549 = vmatpush1.msra.mxu0 %v515
    %550 = vmatprep.subr.mxu0 0.0
    %551 = vmatpush1.msra.mxu0 %v514
    %552 = vmatprep.subr.mxu0 0.0
    %553 = vmatpush1.msra.mxu0 %v513
    %554 = vmatprep.subr.mxu0 0.0
    %555 = vmatpush1.msra.mxu0 %v512
    %556 = vmatprep.subr.mxu0 0.0
    %557 = vmatpush1.msra.mxu0 %v511
    %558 = vmatprep.subr.mxu0 0.0
    %559 = vmatpush1.msra.mxu0 %v510
    %560 = vmatprep.subr.mxu0 0.0
    %561 = vmatpush1.msra.mxu0 %v509
    %562 = vmatprep.subr.mxu0 0.0
    %563 = vmatpush1.msra.mxu0 %v508
    %564 = vmatprep.subr.mxu0 0.0
    %565 = vmatpush1.msra.mxu0 %v507
    %566 = vmatprep.subr.mxu0 0.0
    %567 = vmatpush1.msra.mxu0 %v506
    %568 = vmatprep.subr.mxu0 0.0
    %569 = vmatpush1.msra.mxu0 %v505
    %570 = vmatprep.subr.mxu0 0.0
    %571 = vmatpush1.msra.mxu0 %v504
    %572 = vmatprep.subr.mxu0 0.0
    %573 = vmatpush1.msra.mxu0 %v503
    %574 = vmatprep.subr.mxu0 0.0
    %575 = vmatpush2.msra.mxu0 %v534
    %576 = vmatprep.subr.mxu0 0.0
    %577 = vmatpush2.msra.mxu0 %v533
    %578 = vmatprep.subr.mxu0 0.0
    %579 = vmatpush2.msra.mxu0 %v532
    %580 = vmatprep.subr.mxu0 0.0
    %581 = vmatpush2.msra.mxu0 %v531
    %582 = vmatprep.subr.mxu0 0.0
    %583 = vmatpush2.msra.mxu0 %v530
    %584 = vmatprep.subr.mxu0 0.0
    %585 = vmatpush2.msra.mxu0 %v529
    %586 = vmatprep.subr.mxu0 0.0
    %587 = vmatpush2.msra.mxu0 %v528
    %588 = vmatprep.subr.mxu0 0.0
    %589 = vmatpush2.msra.mxu0 %v527
    %590 = vmatprep.subr.mxu0 0.0
    %591 = vmatpush2.msra.mxu0 %v526
    %592 = vmatprep.subr.mxu0 0.0
    %593 = vmatpush2.msra.mxu0 %v525
    %594 = vmatprep.subr.mxu0 0.0
    %595 = vmatpush2.msra.mxu0 %v524
    %596 = vmatprep.subr.mxu0 0.0
    %597 = vmatpush2.msra.mxu0 %v523
    %598 = vmatprep.subr.mxu0 0.0
    %599 = vmatpush2.msra.mxu0 %v522
    %600 = vmatprep.subr.mxu0 0.0
    %601 = vmatpush2.msra.mxu0 %v521
    %602 = vmatprep.subr.mxu0 0.0
    %603 = vmatpush2.msra.mxu0 %v520
    %604 = vmatprep.subr.mxu0 0.0
    %605 = vmatpush2.msra.mxu0 %v519
    %606 = vmatprep.mubr.f32.mxu0 %v502
    %607 = vmatmul.mubr.f32.gmra.mxu0 %v501
    %v608 = vpop.f32.mrf.mxu0
    %v609 = vadd.f32 %v540, %v608
    %v610 = vpop.f32.mrf.mxu0
    %611 = vdwg.mxu0
    %v612 = vmax.f32 %v609, 0.0
    %v613 = vld [vmem:[%s8] sm:$0xff]
    %v614 = vld [vmem:[%s8 + $0x8] sm:$0xff]
    %v615 = vld [vmem:[%s8 + $0x10] sm:$0xff]
    %v616 = vld [vmem:[%s8 + $0x18] sm:$0xff]
    %v617 = vld [vmem:[%s8 + $0x20] sm:$0xff]
    %v618 = vld [vmem:[%s8 + $0x28] sm:$0xff]
    %v619 = vld [vmem:[%s8 + $0x30] sm:$0xff]
    %v620 = vld [vmem:[%s8 + $0x38] sm:$0xff]
    %v621 = vld [vmem:[%s8 + $0x40] sm:$0xff]
    %v622 = vld [vmem:[%s8 + $0x48] sm:$0xff]
    %v623 = vld [vmem:[%s8 + $0x50] sm:$0xff]
    %v624 = vld [vmem:[%s8 + $0x58] sm:$0xff]
    %v625 = vld [vmem:[%s8 + $0x60] sm:$0xff]
    %v626 = vld [vmem:[%s8 + $0x68] sm:$0xff]
    %v627 = vld [vmem:[%s8 + $0x70] sm:$0xff]
    %v628 = vld [vmem:[%s8 + $0x78] sm:$0xff]
    %v629 = vld [vmem:[%s9] sm:$0x1]
    %v631 = vlaneseq
    %v632 = vshrl.u32 %v631, 7
    %v633 = vsub.s32 0, %v632
    %v634 = vrot.slane %v629, %v633
    %636 = vmatprep.subr.mxu0 0.0
    %637 = vmatpush1.msra.mxu0 %v628
    %638 = vmatprep.subr.mxu0 0.0
    %639 = vmatpush1.msra.mxu0 %v627
    %640 = vmatprep.subr.mxu0 0.0
    %641 = vmatpush1.msra.mxu0 %v626
    %642 = vmatprep.subr.mxu0 0.0
    %643 = vmatpush1.msra.mxu0 %v625
    %644 = vmatprep.subr.mxu0 0.0
    %645 = vmatpush1.msra.mxu0 %v624
    %646 = vmatprep.subr.mxu0 0.0
    %647 = vmatpush1.msra.mxu0 %v623
    %648 = vmatprep.subr.mxu0 0.0
    %649 = vmatpush1.msra.mxu0 %v622
    %650 = vmatprep.subr.mxu0 0.0
    %651 = vmatpush1.msra.mxu0 %v621
    %652 = vmatprep.subr.mxu0 0.0
    %653 = vmatpush1.msra.mxu0 %v620
    %654 = vmatprep.subr.mxu0 0.0
    %655 = vmatpush1.msra.mxu0 %v619
    %656 = vmatprep.subr.mxu0 0.0
    %657 = vmatpush1.msra.mxu0 %v618
    %658 = vmatprep.subr.mxu0 0.0
    %659 = vmatpush1.msra.mxu0 %v617
    %660 = vmatprep.subr.mxu0 0.0
    %661 = vmatpush1.msra.mxu0 %v616
    %662 = vmatprep.subr.mxu0 0.0
    %663 = vmatpush1.msra.mxu0 %v615
    %664 = vmatprep.subr.mxu0 0.0
    %665 = vmatpush1.msra.mxu0 %v614
    %666 = vmatprep.subr.mxu0 0.0
    %667 = vmatpush1.msra.mxu0 %v613
    %668 = vmatprep.subr.mxu0 0.0
    %669 = vmatpush2.msra.mxu0 0.0
    %670 = vmatprep.subr.mxu0 0.0
    %671 = vmatpush2.msra.mxu0 0.0
    %672 = vmatprep.subr.mxu0 0.0
    %673 = vmatpush2.msra.mxu0 0.0
    %674 = vmatprep.subr.mxu0 0.0
    %675 = vmatpush2.msra.mxu0 0.0
    %676 = vmatprep.subr.mxu0 0.0
    %677 = vmatpush2.msra.mxu0 0.0
    %678 = vmatprep.subr.mxu0 0.0
    %679 = vmatpush2.msra.mxu0 0.0
    %680 = vmatprep.subr.mxu0 0.0
    %681 = vmatpush2.msra.mxu0 0.0
    %682 = vmatprep.subr.mxu0 0.0
    %683 = vmatpush2.msra.mxu0 0.0
    %684 = vmatprep.subr.mxu0 0.0
    %685 = vmatpush2.msra.mxu0 0.0
    %686 = vmatprep.subr.mxu0 0.0
    %687 = vmatpush2.msra.mxu0 0.0
    %688 = vmatprep.subr.mxu0 0.0
    %689 = vmatpush2.msra.mxu0 0.0
    %690 = vmatprep.subr.mxu0 0.0
    %691 = vmatpush2.msra.mxu0 0.0
    %692 = vmatprep.subr.mxu0 0.0
    %693 = vmatpush2.msra.mxu0 0.0
    %694 = vmatprep.subr.mxu0 0.0
    %695 = vmatpush2.msra.mxu0 0.0
    %696 = vmatprep.subr.mxu0 0.0
    %697 = vmatpush2.msra.mxu0 0.0
    %698 = vmatprep.subr.mxu0 0.0
    %699 = vmatpush2.msra.mxu0 0.0
    %700 = vmatprep.mubr.f32.mxu0 0.0
    %701 = vmatmul.mubr.f32.gmra.mxu0 %v612
    %v702 = vpop.f32.mrf.mxu0
    %v703 = vadd.f32 %v634, %v702
    %v704 = vpop.f32.mrf.mxu0
    %705 = vdwg.mxu0
    %v706 = vmax.f32 %v703, 0.0
    %v707 = vld [vmem:[%s10] sm:$0x3]
    %v708 = vld [vmem:[%s11] sm:$0xff]
    %v709 = vld [vmem:[%s11 + $0x8] sm:$0xff]
    %v710 = vld [vmem:[%s11 + $0x10] sm:$0xff]
    %v711 = vld [vmem:[%s11 + $0x18] sm:$0xff]
    %v712 = vld [vmem:[%s11 + $0x20] sm:$0xff]
    %v713 = vld [vmem:[%s11 + $0x28] sm:$0xff]
    %v714 = vld [vmem:[%s11 + $0x30] sm:$0xff]
    %v715 = vld [vmem:[%s11 + $0x38] sm:$0xff]
    %vm716 = vcmask 523264
    %v718 = vsel %vm716, %v706, 0
    %720 = vmatprep.subr.mxu0 0.0
    %721 = vmatpush1.msra.mxu0 0.0
    %722 = vmatprep.subr.mxu0 0.0
    %723 = vmatpush1.msra.mxu0 0.0
    %724 = vmatprep.subr.mxu0 0.0
    %725 = vmatpush1.msra.mxu0 0.0
    %726 = vmatprep.subr.mxu0 0.0
    %727 = vmatpush1.msra.mxu0 0.0
    %728 = vmatprep.subr.mxu0 0.0
    %729 = vmatpush1.msra.mxu0 0.0
    %730 = vmatprep.subr.mxu0 0.0
    %731 = vmatpush1.msra.mxu0 0.0
    %732 = vmatprep.subr.mxu0 0.0
    %733 = vmatpush1.msra.mxu0 0.0
    %734 = vmatprep.subr.mxu0 0.0
    %735 = vmatpush1.msra.mxu0 0.0
    %736 = vmatprep.subr.mxu0 0.0
    %737 = vmatpush1.msra.mxu0 %v715
    %738 = vmatprep.subr.mxu0 0.0
    %739 = vmatpush1.msra.mxu0 %v714
    %740 = vmatprep.subr.mxu0 0.0
    %741 = vmatpush1.msra.mxu0 %v713
    %742 = vmatprep.subr.mxu0 0.0
    %743 = vmatpush1.msra.mxu0 %v712
    %744 = vmatprep.subr.mxu0 0.0
    %745 = vmatpush1.msra.mxu0 %v711
    %746 = vmatprep.subr.mxu0 0.0
    %747 = vmatpush1.msra.mxu0 %v710
    %748 = vmatprep.subr.mxu0 0.0
    %749 = vmatpush1.msra.mxu0 %v709
    %750 = vmatprep.subr.mxu0 0.0
    %751 = vmatpush1.msra.mxu0 %v708
    %752 = vmatprep.subr.mxu0 0.0
    %753 = vmatpush2.msra.mxu0 0.0
    %754 = vmatprep.subr.mxu0 0.0
    %755 = vmatpush2.msra.mxu0 0.0
    %756 = vmatprep.subr.mxu0 0.0
    %757 = vmatpush2.msra.mxu0 0.0
    %758 = vmatprep.subr.mxu0 0.0
    %759 = vmatpush2.msra.mxu0 0.0
    %760 = vmatprep.subr.mxu0 0.0
    %761 = vmatpush2.msra.mxu0 0.0
    %762 = vmatprep.subr.mxu0 0.0
    %763 = vmatpush2.msra.mxu0 0.0
    %764 = vmatprep.subr.mxu0 0.0
    %765 = vmatpush2.msra.mxu0 0.0
    %766 = vmatprep.subr.mxu0 0.0
    %767 = vmatpush2.msra.mxu0 0.0
    %768 = vmatprep.subr.mxu0 0.0
    %769 = vmatpush2.msra.mxu0 0.0
    %770 = vmatprep.subr.mxu0 0.0
    %771 = vmatpush2.msra.mxu0 0.0
    %772 = vmatprep.subr.mxu0 0.0
    %773 = vmatpush2.msra.mxu0 0.0
    %774 = vmatprep.subr.mxu0 0.0
    %775 = vmatpush2.msra.mxu0 0.0
    %776 = vmatprep.subr.mxu0 0.0
    %777 = vmatpush2.msra.mxu0 0.0
    %778 = vmatprep.subr.mxu0 0.0
    %779 = vmatpush2.msra.mxu0 0.0
    %780 = vmatprep.subr.mxu0 0.0
    %781 = vmatpush2.msra.mxu0 0.0
    %782 = vmatprep.subr.mxu0 0.0
    %783 = vmatpush2.msra.mxu0 0.0
    %784 = vmatprep.mubr.f32.mxu0 0.0
    %785 = vmatmul.mubr.f32.gmra.mxu0 %v718
    %v786 = vpop.f32.mrf.mxu0
    %v787 = vadd.f32 0.0, %v786
    %v788 = vpop.f32.mrf.mxu0
    %789 = vdwg.mxu0
    %vm790 = vcmask 15360
    %v792 = vsel %vm790, %v404, 0
    %vm794 = vcmask 1041408
    %v796 = vsel %vm794, %v707, 0
    %798 = vmatprep.subr.mxu0 0.0
    %799 = vmatpush1.msra.mxu0 0.0
    %800 = vmatprep.subr.mxu0 0.0
    %801 = vmatpush1.msra.mxu0 0.0
    %802 = vmatprep.subr.mxu0 0.0
    %803 = vmatpush1.msra.mxu0 0.0
    %804 = vmatprep.subr.mxu0 0.0
    %805 = vmatpush1.msra.mxu0 0.0
    %806 = vmatprep.subr.mxu0 0.0
    %807 = vmatpush1.msra.mxu0 0.0
    %808 = vmatprep.subr.mxu0 0.0
    %809 = vmatpush1.msra.mxu0 0.0
    %810 = vmatprep.subr.mxu0 0.0
    %811 = vmatpush1.msra.mxu0 0.0
    %812 = vmatprep.subr.mxu0 0.0
    %813 = vmatpush1.msra.mxu0 0.0
    %814 = vmatprep.subr.mxu0 0.0
    %815 = vmatpush1.msra.mxu0 0.0
    %816 = vmatprep.subr.mxu0 0.0
    %817 = vmatpush1.msra.mxu0 0.0
    %818 = vmatprep.subr.mxu0 0.0
    %819 = vmatpush1.msra.mxu0 0.0
    %820 = vmatprep.subr.mxu0 0.0
    %821 = vmatpush1.msra.mxu0 0.0
    %822 = vmatprep.subr.mxu0 0.0
    %823 = vmatpush1.msra.mxu0 0.0
    %824 = vmatprep.subr.mxu0 0.0
    %825 = vmatpush1.msra.mxu0 0.0
    %826 = vmatprep.subr.mxu0 0.0
    %827 = vmatpush1.msra.mxu0 0.0
    %828 = vmatprep.subr.mxu0 0.0
    %829 = vmatpush1.msra.mxu0 %v796
    %830 = vmatprep.subr.mxu0 0.0
    %831 = vmatpush2.msra.mxu0 0.0
    %832 = vmatprep.subr.mxu0 0.0
    %833 = vmatpush2.msra.mxu0 0.0
    %834 = vmatprep.subr.mxu0 0.0
    %835 = vmatpush2.msra.mxu0 0.0
    %836 = vmatprep.subr.mxu0 0.0
    %837 = vmatpush2.msra.mxu0 0.0
    %838 = vmatprep.subr.mxu0 0.0
    %839 = vmatpush2.msra.mxu0 0.0
    %840 = vmatprep.subr.mxu0 0.0
    %841 = vmatpush2.msra.mxu0 0.0
    %842 = vmatprep.subr.mxu0 0.0
    %843 = vmatpush2.msra.mxu0 0.0
    %844 = vmatprep.subr.mxu0 0.0
    %845 = vmatpush2.msra.mxu0 0.0
    %846 = vmatprep.subr.mxu0 0.0
    %847 = vmatpush2.msra.mxu0 0.0
    %848 = vmatprep.subr.mxu0 0.0
    %849 = vmatpush2.msra.mxu0 0.0
    %850 = vmatprep.subr.mxu0 0.0
    %851 = vmatpush2.msra.mxu0 0.0
    %852 = vmatprep.subr.mxu0 0.0
    %853 = vmatpush2.msra.mxu0 0.0
    %854 = vmatprep.subr.mxu0 0.0
    %855 = vmatpush2.msra.mxu0 0.0
    %856 = vmatprep.subr.mxu0 0.0
    %857 = vmatpush2.msra.mxu0 0.0
    %858 = vmatprep.subr.mxu0 0.0
    %859 = vmatpush2.msra.mxu0 0.0
    %860 = vmatprep.subr.mxu0 0.0
    %861 = vmatpush2.msra.mxu0 0.0
    %862 = vmatprep.mubr.f32.mxu0 0.0
    %863 = vmatmul.mubr.f32.gmra.mxu0 %v792
    %v864 = vpop.f32.mrf.mxu0
    %v865 = vadd.f32 %v787, %v864
    %v866 = vpop.f32.mrf.mxu0
    %867 = vdwg.mxu0
    %v868 = vld [vmem:[%s12] sm:$0x1]
    %v870 = vlaneseq
    %v871 = vshrl.u32 %v870, 7
    %v872 = vsub.s32 0, %v871
    %v873 = vrot.slane %v868, %v872
    %v875 = vadd.f32 %v865, %v873
    %v876 = vmax.f32 %v875, 0.0
    %v877 = vld [vmem:[%s13] sm:$0xff]
    %v878 = vld [vmem:[%s13 + $0x8] sm:$0xff]
    %v879 = vld [vmem:[%s13 + $0x10] sm:$0xff]
    %v880 = vld [vmem:[%s13 + $0x18] sm:$0xff]
    %v881 = vld [vmem:[%s13 + $0x20] sm:$0xff]
    %v882 = vld [vmem:[%s13 + $0x28] sm:$0xff]
    %v883 = vld [vmem:[%s13 + $0x30] sm:$0xff]
    %v884 = vld [vmem:[%s13 + $0x38] sm:$0xff]
    %v885 = vld [vmem:[%s13 + $0x40] sm:$0xff]
    %v886 = vld [vmem:[%s13 + $0x48] sm:$0xff]
    %v887 = vld [vmem:[%s13 + $0x50] sm:$0xff]
    %v888 = vld [vmem:[%s13 + $0x58] sm:$0xff]
    %v889 = vld [vmem:[%s13 + $0x60] sm:$0xff]
    %v890 = vld [vmem:[%s13 + $0x68] sm:$0xff]
    %v891 = vld [vmem:[%s13 + $0x70] sm:$0xff]
    %v892 = vld [vmem:[%s13 + $0x78] sm:$0xff]
    %v893 = vld [vmem:[%s14] sm:$0x1]
    %v895 = vlaneseq
    %v896 = vshrl.u32 %v895, 7
    %v897 = vsub.s32 0, %v896
    %v898 = vrot.slane %v893, %v897
    %900 = vmatprep.subr.mxu0 0.0
    %901 = vmatpush1.msra.mxu0 %v892
    %902 = vmatprep.subr.mxu0 0.0
    %903 = vmatpush1.msra.mxu0 %v891
    %904 = vmatprep.subr.mxu0 0.0
    %905 = vmatpush1.msra.mxu0 %v890
    %906 = vmatprep.subr.mxu0 0.0
    %907 = vmatpush1.msra.mxu0 %v889
    %908 = vmatprep.subr.mxu0 0.0
    %909 = vmatpush1.msra.mxu0 %v888
    %910 = vmatprep.subr.mxu0 0.0
    %911 = vmatpush1.msra.mxu0 %v887
    %912 = vmatprep.subr.mxu0 0.0
    %913 = vmatpush1.msra.mxu0 %v886
    %914 = vmatprep.subr.mxu0 0.0
    %915 = vmatpush1.msra.mxu0 %v885
    %916 = vmatprep.subr.mxu0 0.0
    %917 = vmatpush1.msra.mxu0 %v884
    %918 = vmatprep.subr.mxu0 0.0
    %919 = vmatpush1.msra.mxu0 %v883
    %920 = vmatprep.subr.mxu0 0.0
    %921 = vmatpush1.msra.mxu0 %v882
    %922 = vmatprep.subr.mxu0 0.0
    %923 = vmatpush1.msra.mxu0 %v881
    %924 = vmatprep.subr.mxu0 0.0
    %925 = vmatpush1.msra.mxu0 %v880
    %926 = vmatprep.subr.mxu0 0.0
    %927 = vmatpush1.msra.mxu0 %v879
    %928 = vmatprep.subr.mxu0 0.0
    %929 = vmatpush1.msra.mxu0 %v878
    %930 = vmatprep.subr.mxu0 0.0
    %931 = vmatpush1.msra.mxu0 %v877
    %932 = vmatprep.subr.mxu0 0.0
    %933 = vmatpush2.msra.mxu0 0.0
    %934 = vmatprep.subr.mxu0 0.0
    %935 = vmatpush2.msra.mxu0 0.0
    %936 = vmatprep.subr.mxu0 0.0
    %937 = vmatpush2.msra.mxu0 0.0
    %938 = vmatprep.subr.mxu0 0.0
    %939 = vmatpush2.msra.mxu0 0.0
    %940 = vmatprep.subr.mxu0 0.0
    %941 = vmatpush2.msra.mxu0 0.0
    %942 = vmatprep.subr.mxu0 0.0
    %943 = vmatpush2.msra.mxu0 0.0
    %944 = vmatprep.subr.mxu0 0.0
    %945 = vmatpush2.msra.mxu0 0.0
    %946 = vmatprep.subr.mxu0 0.0
    %947 = vmatpush2.msra.mxu0 0.0
    %948 = vmatprep.subr.mxu0 0.0
    %949 = vmatpush2.msra.mxu0 0.0
    %950 = vmatprep.subr.mxu0 0.0
    %951 = vmatpush2.msra.mxu0 0.0
    %952 = vmatprep.subr.mxu0 0.0
    %953 = vmatpush2.msra.mxu0 0.0
    %954 = vmatprep.subr.mxu0 0.0
    %955 = vmatpush2.msra.mxu0 0.0
    %956 = vmatprep.subr.mxu0 0.0
    %957 = vmatpush2.msra.mxu0 0.0
    %958 = vmatprep.subr.mxu0 0.0
    %959 = vmatpush2.msra.mxu0 0.0
    %960 = vmatprep.subr.mxu0 0.0
    %961 = vmatpush2.msra.mxu0 0.0
    %962 = vmatprep.subr.mxu0 0.0
    %963 = vmatpush2.msra.mxu0 0.0
    %964 = vmatprep.mubr.f32.mxu0 0.0
    %965 = vmatmul.mubr.f32.gmra.mxu0 %v876
    %v966 = vpop.f32.mrf.mxu0
    %v967 = vadd.f32 %v898, %v966
    %v968 = vpop.f32.mrf.mxu0
    %969 = vdwg.mxu0
    %v970 = vxor.u32 %v967, 2147483648
    %v971 = vmul.f32 %v970, 1.442695
    %v972 = vpow.pop %v971
    %v973 = vadd.f32 %v972, 1.0
    %v974 = vrcp.pop %v973
    %v975 = vmul.f32 1.0, %v974
    %vm976 = vcmask 9216
    %977 = vst.msk [vmem:[#allocation2] sm:$0x3] %vm976, %v975
    // Predicated region
    $region62: #{tpu_custom_call.1} parent=1 // pred_check
      _
    $region63: #{tpu_custom_call.1} parent=1 // pred_check_branch
      %979 = sbr.rel (0) target = $region65
    $region64: #{tpu_custom_call.1} parent=1 // pred_region
      %s981 = ssub.s32 32, 32
      %982 = vsyncadd [#allocation3], %s981
      %s984 = sshll.u32 [#allocation2], 4
      %s985 = int_to_ptr.vmem [resolvable:$true] %s984
      %987 = dma.vmem_to_hbm [thread:$0]  %s985, 32, %s15, [#allocation3]
    $region65: #{tpu_custom_call.1} parent=1 // pred_fallthru
      _
    // Predicated region
    $region66: #{tpu_custom_call.1} parent=1 // pred_check
      _
    $region67: #{tpu_custom_call.1} parent=1 // pred_check_branch
      %989 = sbr.rel (0) target = $region69
    $region68: #{tpu_custom_call.1} parent=1 // pred_region
      %990 = dma.done [#allocation3], 32
    $region69: #{tpu_custom_call.1} parent=1 // pred_fallthru
      _
    %991 = vsyncpa [#allocation3], 1

</llo_original>
